<compile_context>
chip_gen: v7x
topology: tpu7x:2x2x1
jax: 0.10.0
libtpu: 0.0.40
codegen_flags: <defaults>
</compile_context>

<pallas_src>
import functools

import jax
import jax.numpy as jnp
import numpy as np
from jax import lax
from jax.experimental import pallas as pl
from jax.experimental.pallas import tpu as pltpu


def _egt_kernel(q_ref, k_ref, v_ref, e_ref, g_ref,
                vatt_ref, hhat_ref, atild_ref,
                *, scale, clip_lo, clip_hi):
    """One (group, query-row-tile) grid step.

    Ref shapes (leading group dim squeezed out by the BlockSpecs):
      q:           (Tq, D)
      k, v:        (L,  D)   -- full key/value set for this group (resident)
      e, g:        (Tq, L)
      vatt:        (Tq, D)
      hhat/atild:  (Tq, L)
    """
    # A_hat[l, m] = scale * sum_d Q[l, d] * K[m, d].
    # The MXU consumes the operands in their native dtype (bf16 stays bf16);
    # accumulation is f32.  Contracting K's feature axis directly avoids an
    # explicit transpose.
    a_hat = lax.dot_general(
        q_ref[...], k_ref[...],
        dimension_numbers=(((1,), (1,)), ((), ())),
        preferred_element_type=jnp.float32) * scale
    a_hat = jnp.clip(a_hat, clip_lo, clip_hi)

    # Add E straight off its vregs (per-vreg promotion to f32): no standalone
    # f32 copy of the (Tq, L) slab.
    h_hat = a_hat + e_ref[...]

    # Exact row-wise softmax over the key axis (fully resident in this tile).
    m = jnp.max(h_hat, axis=-1, keepdims=True)
    p = jnp.exp(h_hat - m)
    denom = jnp.sum(p, axis=-1, keepdims=True)
    # Exact reciprocal: the denom is only a (Tq, 1) column and the kernel is
    # HBM-bound, so the approximate EUP reciprocal saved nothing measurable.
    inv_denom = pl.reciprocal(denom, approx=False)

    # Sigmoid gate in the input dtype (bf16 EUP on v6e/v7x); promotion to f32
    # happens per-vreg in the fused multiply below.
    gates = jax.nn.sigmoid(g_ref[...])
    a_tild = p * (gates * inv_denom)

    # V_att[l, d] = sum_m A_tild[l, m] * V[m, d]; feed the MXU native-dtype
    # operands again, keep f32 accumulation.
    v_att = jnp.dot(a_tild.astype(v_ref.dtype), v_ref[...],
                    preferred_element_type=jnp.float32)

    hhat_ref[...] = h_hat.astype(hhat_ref.dtype)
    atild_ref[...] = a_tild.astype(atild_ref.dtype)
    vatt_ref[...] = v_att.astype(vatt_ref.dtype)


def _vmem_budgets():
    """Per-generation (block_budget_bytes, vmem_limit_cap_bytes)."""
    try:
        cap = int(pltpu.get_tpu_info().vmem_capacity_bytes)
    except Exception:
        cap = 64 << 20          # unknown -> assume the tightest (v7x, 64 MiB/TC)
    if cap >= (96 << 20):       # v5e / v6e: 128 MiB VMEM -> bigger tiles pay off
        return 56 << 20, 96 << 20
    return 24 << 20, 48 << 20   # v7x: 64 MiB per TensorCore; leave scratch headroom


def _choose_row_tile(seq_len, dot_dim, in_itemsize, out_itemsize, block_budget):
    """Largest sublane-aligned row tile Tq whose double-buffered pipeline blocks
    *plus* the f32 in-kernel intermediates fit under `block_budget`."""

    def kernel_bytes(tq):
        in_blocks = (tq * dot_dim                       # Q
                     + 2 * tq * seq_len                 # E, Gates
                     + 2 * seq_len * dot_dim) * in_itemsize   # K, V (resident)
        out_blocks = (tq * dot_dim + 2 * tq * seq_len) * out_itemsize
        pipelined = 2 * (in_blocks + out_blocks)        # x2: double buffering
        # f32 live intermediates: a_hat / h_hat / p / a_tild / gates (+ slack)
        # and the f32 node slabs.
        live = (6 * tq * seq_len + 2 * tq * dot_dim) * 4
        return pipelined + live

    # Sublane granularity: 8 rows (f32), 16 (bf16), 32 (int8/fp8).
    align = max(8, 32 // max(in_itemsize, 1))
    cap = min((seq_len // align) * align, 1024)
    if cap < align:
        # Tiny graphs: a single (ragged) block is the only legal shape anyway.
        return seq_len, kernel_bytes(seq_len)
    tq = align
    for cand in range(align, cap + 1, align):
        if kernel_bytes(cand) <= block_budget:
            tq = cand           # bytes are monotone in tq -> ends at the largest fit
    return tq, kernel_bytes(tq)


def egt_forward_headmajor(Q, K, V, E, G, *,
                          clip_logits_value=(-5.0, 5.0),
                          vatt_dtype=None, mat_dtype=None):
    """Group-major fast path.

    Q/K/V: (..., L, D); E/G: (..., L, L) with identical leading "group" axes —
    e.g. (H,) for one graph, or (B, H) for a batch of graphs.  Batching is just
    more parallel grid work in a single pallas_call (amortizes per-call/per-step
    overhead and gives v7x's two TensorCores work to split).

    Returns V_att (..., L, D), H_hat (..., L, L), A_tild (..., L, L).

    Keep callers in this layout end-to-end: it avoids the HBM-scale
    (L, L, H) <-> (H, L, L) transposes of the PyTorch channel-last convention.
    Pass `mat_dtype=jnp.bfloat16` to halve the dominant L^2 write traffic when
    downstream consumers of H_hat / A_tild tolerate bf16.
    """
    lead = Q.shape[:-2]
    seq_len, dot_dim = Q.shape[-2:]
    assert K.shape == Q.shape and V.shape == Q.shape
    assert E.shape == lead + (seq_len, seq_len)
    assert G.shape == lead + (seq_len, seq_len)

    vatt_dtype = Q.dtype if vatt_dtype is None else jnp.dtype(vatt_dtype)
    mat_dtype = Q.dtype if mat_dtype is None else jnp.dtype(mat_dtype)

    num_groups = int(np.prod(lead)) if lead else 1
    Qf = Q.reshape(num_groups, seq_len, dot_dim)
    Kf = K.reshape(num_groups, seq_len, dot_dim)
    Vf = V.reshape(num_groups, seq_len, dot_dim)
    Ef = E.reshape(num_groups, seq_len, seq_len)
    Gf = G.reshape(num_groups, seq_len, seq_len)

    in_itemsize = jnp.dtype(Q.dtype).itemsize
    out_itemsize = max(jnp.dtype(vatt_dtype).itemsize, jnp.dtype(mat_dtype).itemsize)
    block_budget, limit_cap = _vmem_budgets()
    tq, kernel_bytes = _choose_row_tile(seq_len, dot_dim, in_itemsize,
                                        out_itemsize, block_budget)
    num_row_tiles = pl.cdiv(seq_len, tq)

    kernel = functools.partial(
        _egt_kernel,
        scale=float(dot_dim) ** -0.5,
        clip_lo=float(clip_logits_value[0]),
        clip_hi=float(clip_logits_value[1]),
    )

    # Blocks: one group per outer step; rows tiled by Tq (ragged tail is masked
    # by Pallas); K/V blocks ignore the row index so they are fetched once per
    # group and stay resident across row tiles.
    node_spec = pl.BlockSpec((None, tq, dot_dim), lambda g, i: (g, i, 0))
    kv_spec = pl.BlockSpec((None, seq_len, dot_dim), lambda g, i: (g, 0, 0))
    mat_spec = pl.BlockSpec((None, tq, seq_len), lambda g, i: (g, i, 0))

    vmem_limit = int(min(max(kernel_bytes + (8 << 20), 32 << 20), limit_cap))

    v_att, h_hat, a_tild = pl.pallas_call(
        kernel,
        grid=(num_groups, num_row_tiles),
        in_specs=[node_spec, kv_spec, kv_spec, mat_spec, mat_spec],
        out_specs=[node_spec, mat_spec, mat_spec],
        out_shape=(
            jax.ShapeDtypeStruct((num_groups, seq_len, dot_dim), vatt_dtype),
            jax.ShapeDtypeStruct((num_groups, seq_len, seq_len), mat_dtype),
            jax.ShapeDtypeStruct((num_groups, seq_len, seq_len), mat_dtype),
        ),
        compiler_params=pltpu.CompilerParams(
            # No block revisiting on either axis -> both parallel; the row-tile
            # axis keeps both v7x TensorCores busy even when groups are few.
            dimension_semantics=("parallel", "parallel"),
            vmem_limit_bytes=vmem_limit,
        ),
    )(Qf, Kf, Vf, Ef, Gf)

    return (v_att.reshape(*lead, seq_len, dot_dim),
            h_hat.reshape(*lead, seq_len, seq_len),
            a_tild.reshape(*lead, seq_len, seq_len))


def egt_forward(QKV, E, G, *, num_heads=2, clip_logits_value=(-5.0, 5.0)):
    """PyTorch-convention wrapper.

    QKV: (L, 3*D*H); E/G: (L, L, H).
    Returns V_att (L, D*H), H_hat (L, L, H), A_tild (L, L, H).

    NOTE: the (L, L, H) <-> (H, L, L) transposes below are pure layout plumbing
    for PyTorch compatibility and cost four full HBM passes over the largest
    tensors.  Real pipelines should keep E/G and the consumers of H_hat/A_tild
    head-major end-to-end and call `egt_forward_headmajor` directly (folding the
    head transpose into the producing edge-projection matmul's output layout).
    """
    seq_len, channels = QKV.shape
    assert channels % (num_heads * 3) == 0
    dot_dim = channels // (num_heads * 3)

    qkv = QKV.reshape(seq_len, 3, dot_dim, num_heads)
    Q = jnp.transpose(qkv[:, 0], (2, 0, 1))   # (H, L, D)
    K = jnp.transpose(qkv[:, 1], (2, 0, 1))
    V = jnp.transpose(qkv[:, 2], (2, 0, 1))
    Eh = jnp.transpose(E, (2, 0, 1))          # (H, L, L)
    Gh = jnp.transpose(G, (2, 0, 1))

    v_att_h, h_hat_h, a_tild_h = egt_forward_headmajor(
        Q, K, V, Eh, Gh, clip_logits_value=clip_logits_value)

    H_hat = jnp.transpose(h_hat_h, (1, 2, 0))                       # (L, L, H)
    A_tild = jnp.transpose(a_tild_h, (1, 2, 0))                     # (L, L, H)
    V_att = jnp.transpose(v_att_h, (1, 2, 0)).reshape(seq_len, dot_dim * num_heads)
    return V_att, H_hat, A_tild


def egt_reference(QKV, E, G, *, num_heads=2, clip_logits_value=(-5.0, 5.0)):
    """Pure-JAX reference mirroring the PyTorch forward (eval mode)."""
    L, C = QKV.shape
    dot_dim = C // (num_heads * 3)
    qkv = QKV.reshape(L, 3, dot_dim, num_heads)
    Q, K, V = qkv[:, 0], qkv[:, 1], qkv[:, 2]                       # (L, D, H)
    A_hat = jnp.einsum('ldh,mdh->lmh', Q, K) * dot_dim ** -0.5
    A_hat = jnp.clip(A_hat, clip_logits_value[0], clip_logits_value[1])
    H_hat = A_hat + E
    A_tild = jax.nn.softmax(H_hat, axis=1)
    gates = jax.nn.sigmoid(G)
    A_tild = A_tild * gates
    V_att = jnp.einsum('lmh,mdh->ldh', A_tild, V)
    V_att = V_att.reshape(L, dot_dim * num_heads)
    return V_att, H_hat, A_tild


if __name__ == "__main__":
    num_heads = 2
    L = 8            # number of graph nodes (sequence length)
    dot_dim = 16     # per-head dimension
    C = 3 * dot_dim * num_heads   # 96

    key = jax.random.PRNGKey(0)
    k1, k2, k3 = jax.random.split(key, 3)
    QKV = jax.random.normal(k1, (L, C), dtype=jnp.float32)
    E = jax.random.normal(k2, (L, L, num_heads), dtype=jnp.float32)
    G = jax.random.normal(k3, (L, L, num_heads), dtype=jnp.float32)

    # ---- f32 path (PyTorch layout wrapper) ----------------------------------
    V_att, H_hat, A_tild = egt_forward(QKV, E, G, num_heads=num_heads)
    jax.block_until_ready((V_att, H_hat, A_tild))

    V_ref, H_ref, A_ref = egt_reference(QKV, E, G, num_heads=num_heads)
    # The softmax reciprocal is now exact; remaining tolerance covers the f32
    # matmul precision difference between the XLA reference path (default
    # precision) and the in-kernel MXU path.
    np.testing.assert_allclose(np.asarray(H_hat), np.asarray(H_ref),
                               rtol=1e-2, atol=1e-2)
    np.testing.assert_allclose(np.asarray(A_tild), np.asarray(A_ref),
                               rtol=1e-2, atol=1e-2)
    np.testing.assert_allclose(np.asarray(V_att), np.asarray(V_ref),
                               rtol=1e-2, atol=1e-2)

    # ---- bf16 path (native bf16 matmuls / gating, halves HBM traffic) -------
    QKV_bf = QKV.astype(jnp.bfloat16)
    E_bf = E.astype(jnp.bfloat16)
    G_bf = G.astype(jnp.bfloat16)
    V16, H16, A16 = egt_forward(QKV_bf, E_bf, G_bf, num_heads=num_heads)
    jax.block_until_ready((V16, H16, A16))

    V_r16, H_r16, A_r16 = egt_reference(
        QKV_bf.astype(jnp.float32), E_bf.astype(jnp.float32),
        G_bf.astype(jnp.float32), num_heads=num_heads)
    np.testing.assert_allclose(np.asarray(H16.astype(jnp.float32)),
                               np.asarray(H_r16), rtol=4e-2, atol=4e-2)
    np.testing.assert_allclose(np.asarray(A16.astype(jnp.float32)),
                               np.asarray(A_r16), rtol=4e-2, atol=4e-2)
    np.testing.assert_allclose(np.asarray(V16.astype(jnp.float32)),
                               np.asarray(V_r16), rtol=4e-2, atol=4e-2)

    # ---- batched head-major path (B graphs in one pallas_call) --------------
    B = 3
    kb = jax.random.split(jax.random.PRNGKey(1), 5)
    Qb = jax.random.normal(kb[0], (B, num_heads, L, dot_dim), jnp.float32)
    Kb = jax.random.normal(kb[1], (B, num_heads, L, dot_dim), jnp.float32)
    Vb = jax.random.normal(kb[2], (B, num_heads, L, dot_dim), jnp.float32)
    Eb = jax.random.normal(kb[3], (B, num_heads, L, L), jnp.float32)
    Gb = jax.random.normal(kb[4], (B, num_heads, L, L), jnp.float32)
    vb, hb, ab = egt_forward_headmajor(Qb, Kb, Vb, Eb, Gb)
    jax.block_until_ready((vb, hb, ab))

    a_hat_r = jnp.einsum('bhld,bhmd->bhlm', Qb, Kb) * dot_dim ** -0.5
    h_r = jnp.clip(a_hat_r, -5.0, 5.0) + Eb
    a_r = jax.nn.softmax(h_r, axis=-1) * jax.nn.sigmoid(Gb)
    v_r = jnp.einsum('bhlm,bhmd->bhld', a_r, Vb)
    np.testing.assert_allclose(np.asarray(hb), np.asarray(h_r), rtol=1e-2, atol=1e-2)
    np.testing.assert_allclose(np.asarray(ab), np.asarray(a_r), rtol=1e-2, atol=1e-2)
    np.testing.assert_allclose(np.asarray(vb), np.asarray(v_r), rtol=1e-2, atol=1e-2)

    print("KERNEL_OK")
</pallas_src>

<mosaic_0001>
module attributes {stable_mosaic.version = 11 : i64} {
  func.func @_egt_kernel(%arg0: i32, %arg1: i32, %arg2: memref<1x8x16xf32, #tpu.memory_space<vmem>>, %arg3: memref<1x8x16xf32, #tpu.memory_space<vmem>>, %arg4: memref<1x8x16xf32, #tpu.memory_space<vmem>>, %arg5: memref<1x8x8xf32, #tpu.memory_space<vmem>>, %arg6: memref<1x8x8xf32, #tpu.memory_space<vmem>>, %arg7: memref<1x8x16xf32, #tpu.memory_space<vmem>>, %arg8: memref<1x8x8xf32, #tpu.memory_space<vmem>>, %arg9: memref<1x8x8xf32, #tpu.memory_space<vmem>>) attributes {dimension_semantics = [#tpu.dimension_semantics<parallel>, #tpu.dimension_semantics<parallel>], iteration_bounds = array<i64: 2, 1>, scalar_prefetch = 0 : i64, scratch_operands = 0 : i64, tpu.core_type = #tpu.core_type<tc>, window_params = [{transform_indices = @transform_0, window_bounds = array<i64: 1, 8, 16>}, {transform_indices = @transform_1, window_bounds = array<i64: 1, 8, 16>}, {transform_indices = @transform_2, window_bounds = array<i64: 1, 8, 16>}, {transform_indices = @transform_3, window_bounds = array<i64: 1, 8, 8>}, {transform_indices = @transform_4, window_bounds = array<i64: 1, 8, 8>}, {transform_indices = @transform_5, window_bounds = array<i64: 1, 8, 16>}, {transform_indices = @transform_6, window_bounds = array<i64: 1, 8, 8>}, {transform_indices = @transform_7, window_bounds = array<i64: 1, 8, 8>}]} {
    %c0 = arith.constant 0 : index
    %c0_0 = arith.constant 0 : index
    %c0_1 = arith.constant 0 : index
    %0 = vector.load %arg2[%c0, %c0_0, %c0_1] : memref<1x8x16xf32, #tpu.memory_space<vmem>>, vector<1x8x16xf32>
    %1 = vector.shape_cast %0 : vector<1x8x16xf32> to vector<8x16xf32>
    %c0_2 = arith.constant 0 : index
    %c0_3 = arith.constant 0 : index
    %c0_4 = arith.constant 0 : index
    %2 = vector.load %arg3[%c0_2, %c0_3, %c0_4] : memref<1x8x16xf32, #tpu.memory_space<vmem>>, vector<1x8x16xf32>
    %3 = vector.shape_cast %2 : vector<1x8x16xf32> to vector<8x16xf32>
    %cst = arith.constant dense<0.000000e+00> : vector<8x8xf32>
    %4 = tpu.matmul %1, %3, %cst {dimension_numbers = #tpu.dot_dimension_numbers<[1], [1], [0], [0], [0, 0, 1, 0], [], []>} : vector<8x16xf32>, vector<8x16xf32>, vector<8x8xf32> -> vector<8x8xf32>
    %cst_5 = arith.constant 2.500000e-01 : f32
    %5 = vector.broadcast %cst_5 : f32 to vector<8x8xf32>
    %6 = arith.mulf %4, %5 : vector<8x8xf32>
    %cst_6 = arith.constant -5.000000e+00 : f32
    %cst_7 = arith.constant 5.000000e+00 : f32
    %7 = vector.broadcast %cst_6 : f32 to vector<8x8xf32>
    %8 = arith.maximumf %7, %6 : vector<8x8xf32>
    %9 = vector.broadcast %cst_7 : f32 to vector<8x8xf32>
    %10 = arith.minimumf %9, %8 : vector<8x8xf32>
    %c0_8 = arith.constant 0 : index
    %c0_9 = arith.constant 0 : index
    %c0_10 = arith.constant 0 : index
    %11 = vector.load %arg5[%c0_8, %c0_9, %c0_10] : memref<1x8x8xf32, #tpu.memory_space<vmem>>, vector<1x8x8xf32>
    %12 = vector.shape_cast %11 : vector<1x8x8xf32> to vector<8x8xf32>
    %13 = arith.addf %10, %12 : vector<8x8xf32>
    %cst_11 = arith.constant dense<0xFF800000> : vector<8xf32>
    %14 = vector.multi_reduction <maximumf>, %13, %cst_11 [1] : vector<8x8xf32> to vector<8xf32>
    %15 = vector.shape_cast %14 : vector<8xf32> to vector<8x1xf32>
    %16 = vector.broadcast %15 : vector<8x1xf32> to vector<8x8xf32>
    %17 = arith.subf %13, %16 : vector<8x8xf32>
    %18 = math.exp %17 : vector<8x8xf32>
    %cst_12 = arith.constant dense<0.000000e+00> : vector<8xf32>
    %19 = vector.multi_reduction <add>, %18, %cst_12 [1] : vector<8x8xf32> to vector<8xf32>
    %20 = vector.shape_cast %19 : vector<8xf32> to vector<8x1xf32>
    %21 = tpu.reciprocal %20 : vector<8x1xf32> -> vector<8x1xf32>
    %c0_13 = arith.constant 0 : index
    %c0_14 = arith.constant 0 : index
    %c0_15 = arith.constant 0 : index
    %22 = vector.load %arg6[%c0_13, %c0_14, %c0_15] : memref<1x8x8xf32, #tpu.memory_space<vmem>>, vector<1x8x8xf32>
    %23 = vector.shape_cast %22 : vector<1x8x8xf32> to vector<8x8xf32>
    %24 = arith.negf %23 : vector<8x8xf32>
    %25 = math.exp %24 : vector<8x8xf32>
    %cst_16 = arith.constant 1.000000e+00 : f32
    %26 = vector.broadcast %cst_16 : f32 to vector<8x8xf32>
    %27 = arith.addf %26, %25 : vector<8x8xf32>
    %28 = arith.divf %26, %27 : vector<8x8xf32>
    %29 = vector.broadcast %21 : vector<8x1xf32> to vector<8x8xf32>
    %30 = arith.mulf %28, %29 : vector<8x8xf32>
    %31 = arith.mulf %18, %30 : vector<8x8xf32>
    %c0_17 = arith.constant 0 : index
    %c0_18 = arith.constant 0 : index
    %c0_19 = arith.constant 0 : index
    %32 = vector.load %arg4[%c0_17, %c0_18, %c0_19] : memref<1x8x16xf32, #tpu.memory_space<vmem>>, vector<1x8x16xf32>
    %33 = vector.shape_cast %32 : vector<1x8x16xf32> to vector<8x16xf32>
    %cst_20 = arith.constant dense<0.000000e+00> : vector<8x16xf32>
    %34 = tpu.matmul %31, %33, %cst_20 {dimension_numbers = #tpu.dot_dimension_numbers<[1], [0], [0], [1], [0, 0, 1, 1], [], []>} : vector<8x8xf32>, vector<8x16xf32>, vector<8x16xf32> -> vector<8x16xf32>
    %c0_21 = arith.constant 0 : index
    %c0_22 = arith.constant 0 : index
    %c0_23 = arith.constant 0 : index
    %35 = vector.load %arg8[%c0_21, %c0_22, %c0_23] : memref<1x8x8xf32, #tpu.memory_space<vmem>>, vector<1x8x8xf32>
    %36 = vector.shape_cast %35 : vector<1x8x8xf32> to vector<8x8xf32>
    %37 = vector.shape_cast %13 : vector<8x8xf32> to vector<1x8x8xf32>
    tpu.vector_store %arg8[%c0_21, %c0_22, %c0_23], %37 {strides = array<i32>} : memref<1x8x8xf32, #tpu.memory_space<vmem>>, vector<1x8x8xf32>,
    %c0_24 = arith.constant 0 : index
    %c0_25 = arith.constant 0 : index
    %c0_26 = arith.constant 0 : index
    %38 = vector.load %arg9[%c0_24, %c0_25, %c0_26] : memref<1x8x8xf32, #tpu.memory_space<vmem>>, vector<1x8x8xf32>
    %39 = vector.shape_cast %38 : vector<1x8x8xf32> to vector<8x8xf32>
    %40 = vector.shape_cast %31 : vector<8x8xf32> to vector<1x8x8xf32>
    tpu.vector_store %arg9[%c0_24, %c0_25, %c0_26], %40 {strides = array<i32>} : memref<1x8x8xf32, #tpu.memory_space<vmem>>, vector<1x8x8xf32>,
    %c0_27 = arith.constant 0 : index
    %c0_28 = arith.constant 0 : index
    %c0_29 = arith.constant 0 : index
    %41 = vector.load %arg7[%c0_27, %c0_28, %c0_29] : memref<1x8x16xf32, #tpu.memory_space<vmem>>, vector<1x8x16xf32>
    %42 = vector.shape_cast %41 : vector<1x8x16xf32> to vector<8x16xf32>
    %43 = vector.shape_cast %34 : vector<8x16xf32> to vector<1x8x16xf32>
    tpu.vector_store %arg7[%c0_27, %c0_28, %c0_29], %43 {strides = array<i32>} : memref<1x8x16xf32, #tpu.memory_space<vmem>>, vector<1x8x16xf32>,
    return
  }
  func.func @transform_0(%arg0: i32, %arg1: i32) -> (i32, i32, i32) {
    %c0_i32 = arith.constant 0 : i32
    %c0_i32_0 = arith.constant 0 : i32
    return %arg0, %arg1, %c0_i32 : i32, i32, i32
  }
  func.func @transform_1(%arg0: i32, %arg1: i32) -> (i32, i32, i32) {
    %c0_i32 = arith.constant 0 : i32
    %c0_i32_0 = arith.constant 0 : i32
    %c0_i32_1 = arith.constant 0 : i32
    return %arg0, %c0_i32, %c0_i32_0 : i32, i32, i32
  }
  func.func @transform_2(%arg0: i32, %arg1: i32) -> (i32, i32, i32) {
    %c0_i32 = arith.constant 0 : i32
    %c0_i32_0 = arith.constant 0 : i32
    %c0_i32_1 = arith.constant 0 : i32
    return %arg0, %c0_i32, %c0_i32_0 : i32, i32, i32
  }
  func.func @transform_3(%arg0: i32, %arg1: i32) -> (i32, i32, i32) {
    %c0_i32 = arith.constant 0 : i32
    %c0_i32_0 = arith.constant 0 : i32
    return %arg0, %arg1, %c0_i32 : i32, i32, i32
  }
  func.func @transform_4(%arg0: i32, %arg1: i32) -> (i32, i32, i32) {
    %c0_i32 = arith.constant 0 : i32
    %c0_i32_0 = arith.constant 0 : i32
    return %arg0, %arg1, %c0_i32 : i32, i32, i32
  }
  func.func @transform_5(%arg0: i32, %arg1: i32) -> (i32, i32, i32) {
    %c0_i32 = arith.constant 0 : i32
    %c0_i32_0 = arith.constant 0 : i32
    return %arg0, %arg1, %c0_i32 : i32, i32, i32
  }
  func.func @transform_6(%arg0: i32, %arg1: i32) -> (i32, i32, i32) {
    %c0_i32 = arith.constant 0 : i32
    %c0_i32_0 = arith.constant 0 : i32
    return %arg0, %arg1, %c0_i32 : i32, i32, i32
  }
  func.func @transform_7(%arg0: i32, %arg1: i32) -> (i32, i32, i32) {
    %c0_i32 = arith.constant 0 : i32
    %c0_i32_0 = arith.constant 0 : i32
    return %arg0, %arg1, %c0_i32 : i32, i32, i32
  }
}

</mosaic_0001>

<llo_original>
// kernel: tpu_custom_call.1
$region0: #{tpu_custom_call.1}
  #allocation0 [shape = 'u32[]', space=smem, size = 0x4, offset = 0x4, fixed_abs, tag = 'smem constant byte address 0x4 - core index']
  #allocation1 [shape = 'u32[144,128]{1,0:T(1,128)}', space=vmem, size = 0x12000, scoped, tag = 'internal scratch']
  %s0 = inlined_call_operand.hbm [shape: f32[2,8,16], index: 0, kind: input, shape index: {}]
  %s1 = inlined_call_operand.hbm [shape: f32[2,8,16], index: 1, kind: input, shape index: {}]
  %s2 = inlined_call_operand.hbm [shape: f32[2,8,16], index: 2, kind: input, shape index: {}]
  %s3 = inlined_call_operand.hbm [shape: f32[2,8,8], index: 3, kind: input, shape index: {}]
  %s4 = inlined_call_operand.hbm [shape: f32[2,8,8], index: 4, kind: input, shape index: {}]
  %s5 = inlined_call_operand.hbm [shape: f32[2,8,16], index: 5, kind: output, shape index: {0}]
  %s6 = inlined_call_operand.hbm [shape: f32[2,8,8], index: 6, kind: output, shape index: {1}]
  %s7 = inlined_call_operand.hbm [shape: f32[2,8,8], index: 7, kind: output, shape index: {2}]
  %8 = xla_tuple %s5, %s6, %s7
  %s9 = sld [smem:[#allocation0]]
  $region89: #{tpu_custom_call.1} parent=0
    _
  %s11 = ssub.s32 1, %s9
  %s12 = scalar_select 0, %s11, %s9
  $region1: #{tpu_custom_call.1} parent=0
    #allocation2 [shape = 'u8[8192]{0}', space=vmem, size = 0x2000, scoped, tag = 'input window, operand 0']
    #allocation3 [shape = 's32[2]{0}', space=sflag, size = 0x8, scoped, tag = 'scoped memory for tpu_custom_call.1']
    #allocation4 [shape = 's32[2]{0}', space=sflag, size = 0x8, scoped, tag = 'scoped memory for tpu_custom_call.1']
    #allocation5 [shape = 'u8[8192]{0}', space=vmem, size = 0x2000, scoped, tag = 'input window, operand 1']
    #allocation6 [shape = 's32[2]{0}', space=sflag, size = 0x8, scoped, tag = 'scoped memory for tpu_custom_call.1']
    #allocation7 [shape = 'u8[8192]{0}', space=vmem, size = 0x2000, scoped, tag = 'input window, operand 2']
    #allocation8 [shape = 'u8[8192]{0}', space=vmem, size = 0x2000, scoped, tag = 'input window, operand 3']
    #allocation9 [shape = 's32[2]{0}', space=sflag, size = 0x8, scoped, tag = 'scoped memory for tpu_custom_call.1']
    #allocation10 [shape = 'u8[8192]{0}', space=vmem, size = 0x2000, scoped, tag = 'input window, operand 4']
    #allocation11 [shape = 'u8[8192]{0}', space=vmem, size = 0x2000, scoped, tag = 'output window, operand 0']
    #allocation12 [shape = 'u8[8192]{0}', space=vmem, size = 0x2000, scoped, tag = 'output window, operand 1']
    #allocation13 [shape = 's32[2]{0}', space=sflag, size = 0x8, scoped, tag = 'scoped memory for tpu_custom_call.1']
    #allocation14 [shape = 'u8[8192]{0}', space=vmem, size = 0x2000, scoped, tag = 'output window, operand 2']
    %13 = vsyncpa [#allocation3], 0
    %s14 = scalar_lea.sflag [#allocation3], 1
    %15 = vsyncpa %s14, 0
    %16 = vsyncpa [#allocation6], 0
    %s17 = scalar_lea.sflag [#allocation6], 1
    %18 = vsyncpa %s17, 0
    %19 = vsyncpa [#allocation9], 0
    %s20 = scalar_lea.sflag [#allocation9], 1
    %21 = vsyncpa %s20, 0
    %22 = vsyncpa [#allocation4], 0
    %s23 = scalar_lea.sflag [#allocation4], 1
    %24 = vsyncpa %s23, 0
    %25 = vsyncpa [#allocation13], 0
    %s26 = scalar_lea.sflag [#allocation13], 1
    %27 = vsyncpa %s26, 0
    loop: start=0, step=1, limit=4
    $region2: #{tpu_custom_call.1} parent=1 // loop_pre_header
      _
    $region3: #{tpu_custom_call.1} parent=1 // loop_header
      %s29 = sphi 0, %s33
      %p30 = scmp.ge.s32.totalorder %s29, 4
      %s36 = sphi 0, %s48
      %s37 = sphi 0, %s44
      %s38 = sphi 0, %s36
      %s39 = sphi 0, %s37
      %s40 = sphi 0, %s38
      %s41 = sphi 0, %s39
      %s53 = sphi 0, %s55
      %s56 = sphi 0, %s53
      %s57 = sphi 0, %s56
      %s73 = sphi 0, %s57
      %s79 = sphi 0, %s81
      %s82 = sphi 0, %s79
      %s83 = sphi 0, %s82
      %s99 = sphi 0, %s83
      %s105 = sphi 0, %s107
      %s108 = sphi 0, %s105
      %s109 = sphi 0, %s108
      %s125 = sphi 0, %s109
      %s133 = sphi 0, %s135
      %s136 = sphi 0, %s133
      %s137 = sphi 0, %s136
      %s153 = sphi 0, %s137
      %s161 = sphi 0, %s163
      %s164 = sphi 0, %s161
      %s165 = sphi 0, %s164
      %s181 = sphi 0, %s165
      %s189 = sphi 0, %s191
      %s192 = sphi 0, %s189
      %s193 = sphi 0, %s192
      %s209 = sphi 0, %s193
      %s217 = sphi 0, %s219
      %s220 = sphi 0, %s217
      %s221 = sphi 0, %s220
      %s237 = sphi 0, %s221
      %s245 = sphi 0, %s247
      %s248 = sphi 0, %s245
      %s249 = sphi 0, %s248
      %s265 = sphi 0, %s249
    $region4: #{tpu_custom_call.1} parent=1 // loop_header_branch
      %32 = sbr.rel (%p30) target = $region8
    $region5: #{tpu_custom_call.1} parent=1 // loop_body
      %s34 = ssub.s32 %s29, 1
      %s35 = ssub.s32 %s29, 2
      %s42 = sadd.s32 1, %s37
      %p43 = scmp.ge.s32.totalorder %s42, 1
      %s44 = scalar_select %p43, 0, %s42
      %s45 = sadd.s32 1, %s36
      %s46 = scalar_select %p43, %s45, %s36
      %p47 = scmp.ge.s32.totalorder %s46, 2
      %s48 = scalar_select %p47, 0, %s46
      %s49 = ssub.s32 %s36, %s48
      %s50 = ssub.s32 %s37, %s44
      %s51 = sor.u32 %s49, %s50
      %p52 = scmp.eq.s32.totalorder %s51, 0
      %s54 = sadd.s32 %s53, 1
      %s55 = scalar_select %p52, %s53, %s54
      %p58 = pneg %p52
      %p59 = scmp.eq.s32.totalorder %s29, 1
      %p60 = por %p58, %p59
      %p61 = scmp.ne.s32.totalorder %s53, %s56
      %p62 = scmp.eq.s32.totalorder %s29, 0
      %p63 = por %p61, %p62
      %p64 = scmp.ne.s32.totalorder %s53, %s56
      %p65 = scmp.eq.s32.totalorder %s34, 1
      %p66 = por %p64, %p65
      %p67 = scmp.ne.s32.totalorder %s56, %s57
      %p68 = scmp.eq.s32.totalorder %s34, 0
      %p69 = por %p67, %p68
      %p70 = scmp.ne.s32.totalorder %s56, %s57
      %p71 = scmp.eq.s32.totalorder %s35, 1
      %p72 = por %p70, %p71
      %p74 = scmp.ne.s32.totalorder %s57, %s73
      %p75 = scmp.eq.s32.totalorder %s35, 0
      %p76 = por %p74, %p75
      %s77 = ssub.s32 %s36, %s48
      %p78 = scmp.eq.s32.totalorder %s77, 0
      %s80 = sadd.s32 %s79, 1
      %s81 = scalar_select %p78, %s79, %s80
      %p84 = pneg %p78
      %p85 = scmp.eq.s32.totalorder %s29, 1
      %p86 = por %p84, %p85
      %p87 = scmp.ne.s32.totalorder %s79, %s82
      %p88 = scmp.eq.s32.totalorder %s29, 0
      %p89 = por %p87, %p88
      %p90 = scmp.ne.s32.totalorder %s79, %s82
      %p91 = scmp.eq.s32.totalorder %s34, 1
      %p92 = por %p90, %p91
      %p93 = scmp.ne.s32.totalorder %s82, %s83
      %p94 = scmp.eq.s32.totalorder %s34, 0
      %p95 = por %p93, %p94
      %p96 = scmp.ne.s32.totalorder %s82, %s83
      %p97 = scmp.eq.s32.totalorder %s35, 1
      %p98 = por %p96, %p97
      %p100 = scmp.ne.s32.totalorder %s83, %s99
      %p101 = scmp.eq.s32.totalorder %s35, 0
      %p102 = por %p100, %p101
      %s103 = ssub.s32 %s36, %s48
      %p104 = scmp.eq.s32.totalorder %s103, 0
      %s106 = sadd.s32 %s105, 1
      %s107 = scalar_select %p104, %s105, %s106
      %p110 = pneg %p104
      %p111 = scmp.eq.s32.totalorder %s29, 1
      %p112 = por %p110, %p111
      %p113 = scmp.ne.s32.totalorder %s105, %s108
      %p114 = scmp.eq.s32.totalorder %s29, 0
      %p115 = por %p113, %p114
      %p116 = scmp.ne.s32.totalorder %s105, %s108
      %p117 = scmp.eq.s32.totalorder %s34, 1
      %p118 = por %p116, %p117
      %p119 = scmp.ne.s32.totalorder %s108, %s109
      %p120 = scmp.eq.s32.totalorder %s34, 0
      %p121 = por %p119, %p120
      %p122 = scmp.ne.s32.totalorder %s108, %s109
      %p123 = scmp.eq.s32.totalorder %s35, 1
      %p124 = por %p122, %p123
      %p126 = scmp.ne.s32.totalorder %s109, %s125
      %p127 = scmp.eq.s32.totalorder %s35, 0
      %p128 = por %p126, %p127
      %s129 = ssub.s32 %s36, %s48
      %s130 = ssub.s32 %s37, %s44
      %s131 = sor.u32 %s129, %s130
      %p132 = scmp.eq.s32.totalorder %s131, 0
      %s134 = sadd.s32 %s133, 1
      %s135 = scalar_select %p132, %s133, %s134
      %p138 = pneg %p132
      %p139 = scmp.eq.s32.totalorder %s29, 1
      %p140 = por %p138, %p139
      %p141 = scmp.ne.s32.totalorder %s133, %s136
      %p142 = scmp.eq.s32.totalorder %s29, 0
      %p143 = por %p141, %p142
      %p144 = scmp.ne.s32.totalorder %s133, %s136
      %p145 = scmp.eq.s32.totalorder %s34, 1
      %p146 = por %p144, %p145
      %p147 = scmp.ne.s32.totalorder %s136, %s137
      %p148 = scmp.eq.s32.totalorder %s34, 0
      %p149 = por %p147, %p148
      %p150 = scmp.ne.s32.totalorder %s136, %s137
      %p151 = scmp.eq.s32.totalorder %s35, 1
      %p152 = por %p150, %p151
      %p154 = scmp.ne.s32.totalorder %s137, %s153
      %p155 = scmp.eq.s32.totalorder %s35, 0
      %p156 = por %p154, %p155
      %s157 = ssub.s32 %s36, %s48
      %s158 = ssub.s32 %s37, %s44
      %s159 = sor.u32 %s157, %s158
      %p160 = scmp.eq.s32.totalorder %s159, 0
      %s162 = sadd.s32 %s161, 1
      %s163 = scalar_select %p160, %s161, %s162
      %p166 = pneg %p160
      %p167 = scmp.eq.s32.totalorder %s29, 1
      %p168 = por %p166, %p167
      %p169 = scmp.ne.s32.totalorder %s161, %s164
      %p170 = scmp.eq.s32.totalorder %s29, 0
      %p171 = por %p169, %p170
      %p172 = scmp.ne.s32.totalorder %s161, %s164
      %p173 = scmp.eq.s32.totalorder %s34, 1
      %p174 = por %p172, %p173
      %p175 = scmp.ne.s32.totalorder %s164, %s165
      %p176 = scmp.eq.s32.totalorder %s34, 0
      %p177 = por %p175, %p176
      %p178 = scmp.ne.s32.totalorder %s164, %s165
      %p179 = scmp.eq.s32.totalorder %s35, 1
      %p180 = por %p178, %p179
      %p182 = scmp.ne.s32.totalorder %s165, %s181
      %p183 = scmp.eq.s32.totalorder %s35, 0
      %p184 = por %p182, %p183
      %s185 = ssub.s32 %s36, %s48
      %s186 = ssub.s32 %s37, %s44
      %s187 = sor.u32 %s185, %s186
      %p188 = scmp.eq.s32.totalorder %s187, 0
      %s190 = sadd.s32 %s189, 1
      %s191 = scalar_select %p188, %s189, %s190
      %p194 = pneg %p188
      %p195 = scmp.eq.s32.totalorder %s29, 1
      %p196 = por %p194, %p195
      %p197 = scmp.ne.s32.totalorder %s189, %s192
      %p198 = scmp.eq.s32.totalorder %s29, 0
      %p199 = por %p197, %p198
      %p200 = scmp.ne.s32.totalorder %s189, %s192
      %p201 = scmp.eq.s32.totalorder %s34, 1
      %p202 = por %p200, %p201
      %p203 = scmp.ne.s32.totalorder %s192, %s193
      %p204 = scmp.eq.s32.totalorder %s34, 0
      %p205 = por %p203, %p204
      %p206 = scmp.ne.s32.totalorder %s192, %s193
      %p207 = scmp.eq.s32.totalorder %s35, 1
      %p208 = por %p206, %p207
      %p210 = scmp.ne.s32.totalorder %s193, %s209
      %p211 = scmp.eq.s32.totalorder %s35, 0
      %p212 = por %p210, %p211
      %s213 = ssub.s32 %s36, %s48
      %s214 = ssub.s32 %s37, %s44
      %s215 = sor.u32 %s213, %s214
      %p216 = scmp.eq.s32.totalorder %s215, 0
      %s218 = sadd.s32 %s217, 1
      %s219 = scalar_select %p216, %s217, %s218
      %p222 = pneg %p216
      %p223 = scmp.eq.s32.totalorder %s29, 1
      %p224 = por %p222, %p223
      %p225 = scmp.ne.s32.totalorder %s217, %s220
      %p226 = scmp.eq.s32.totalorder %s29, 0
      %p227 = por %p225, %p226
      %p228 = scmp.ne.s32.totalorder %s217, %s220
      %p229 = scmp.eq.s32.totalorder %s34, 1
      %p230 = por %p228, %p229
      %p231 = scmp.ne.s32.totalorder %s220, %s221
      %p232 = scmp.eq.s32.totalorder %s34, 0
      %p233 = por %p231, %p232
      %p234 = scmp.ne.s32.totalorder %s220, %s221
      %p235 = scmp.eq.s32.totalorder %s35, 1
      %p236 = por %p234, %p235
      %p238 = scmp.ne.s32.totalorder %s221, %s237
      %p239 = scmp.eq.s32.totalorder %s35, 0
      %p240 = por %p238, %p239
      %s241 = ssub.s32 %s36, %s48
      %s242 = ssub.s32 %s37, %s44
      %s243 = sor.u32 %s241, %s242
      %p244 = scmp.eq.s32.totalorder %s243, 0
      %s246 = sadd.s32 %s245, 1
      %s247 = scalar_select %p244, %s245, %s246
      %p250 = pneg %p244
      %p251 = scmp.eq.s32.totalorder %s29, 1
      %p252 = por %p250, %p251
      %p253 = scmp.ne.s32.totalorder %s245, %s248
      %p254 = scmp.eq.s32.totalorder %s29, 0
      %p255 = por %p253, %p254
      %p256 = scmp.ne.s32.totalorder %s245, %s248
      %p257 = scmp.eq.s32.totalorder %s34, 1
      %p258 = por %p256, %p257
      %p259 = scmp.ne.s32.totalorder %s248, %s249
      %p260 = scmp.eq.s32.totalorder %s34, 0
      %p261 = por %p259, %p260
      %p262 = scmp.ne.s32.totalorder %s248, %s249
      %p263 = scmp.eq.s32.totalorder %s35, 1
      %p264 = por %p262, %p263
      %p266 = scmp.ne.s32.totalorder %s249, %s265
      %p267 = scmp.eq.s32.totalorder %s35, 0
      %p268 = por %p266, %p267
      %p269 = scmp.le.s32.totalorder 1, %s29
      %p270 = scmp.lt.s32.totalorder %s29, 3
      %p271 = pnand %p269, %p270
      %p272 = pneg %p271
      // Predicated region
      $region9: #{tpu_custom_call.1} parent=5 // pred_check
        _
      $region10: #{tpu_custom_call.1} parent=5 // pred_check_branch
        %274 = sbr.rel (%p271) target = $region12
      $region11: #{tpu_custom_call.1} parent=5 // pred_region
        %s275 = ssub.s32 %s29, 1
      $region12: #{tpu_custom_call.1} parent=5 // pred_fallthru
        _
      %p276 = scmp.lt.s32.totalorder %s29, 2
      // Predicated region
      $region13: #{tpu_custom_call.1} parent=5 // pred_check
        %p277 = pneg %p276
      $region14: #{tpu_custom_call.1} parent=5 // pred_check_branch
        %279 = sbr.rel (%p277) target = $region16
      $region15: #{tpu_custom_call.1} parent=5 // pred_region
        // Predicated region
        $region17: #{tpu_custom_call.1} parent=15 // pred_check
          %p280 = pneg %p63
        $region18: #{tpu_custom_call.1} parent=15 // pred_check_branch
          %282 = sbr.rel (%p280) target = $region20
        $region19: #{tpu_custom_call.1} parent=15 // pred_region
          %s283 = sand.u32 %s53, 1
          %s284 = scalar_lea.sflag [#allocation3], %s283
          %s285 = sand.u32 %s53, 1
          %s286 = smul.addr %s285, 8
          %s287 = scalar_lea.vmem [#allocation2], %s286
          %s289 = ssub.s32 128, 128
          %290 = vsyncadd %s284, %s289
          %s291 = sadd.s32 %s37, %s36
          %s292 = smul.addr %s291, 128
          %s293 = scalar_lea.hbm %s0, %s292
          %s295 = sshll.u32 %s287, 4
          %s296 = int_to_ptr.vmem [resolvable:$true] %s295
          %298 = dma.hbm_to_vmem [thread:$0]  %s293, 128, %s296, %s284
        $region20: #{tpu_custom_call.1} parent=15 // pred_fallthru
          _
        // Predicated region
        $region21: #{tpu_custom_call.1} parent=15 // pred_check
          %p299 = pneg %p89
        $region22: #{tpu_custom_call.1} parent=15 // pred_check_branch
          %301 = sbr.rel (%p299) target = $region24
        $region23: #{tpu_custom_call.1} parent=15 // pred_region
          %s302 = sand.u32 %s29, 1
          %s303 = scalar_lea.sflag [#allocation6], %s302
          %s304 = sand.u32 %s79, 1
          %s305 = smul.addr %s304, 8
          %s306 = scalar_lea.vmem [#allocation5], %s305
          %s308 = ssub.s32 128, 128
          %309 = vsyncadd %s303, %s308
          %s310 = smul.addr %s36, 128
          %s311 = scalar_lea.hbm %s1, %s310
          %s313 = sshll.u32 %s306, 4
          %s314 = int_to_ptr.vmem [resolvable:$true] %s313
          %316 = dma.hbm_to_vmem [thread:$0]  %s311, 128, %s314, %s303
        $region24: #{tpu_custom_call.1} parent=15 // pred_fallthru
          _
        // Predicated region
        $region25: #{tpu_custom_call.1} parent=15 // pred_check
          %p317 = pneg %p115
        $region26: #{tpu_custom_call.1} parent=15 // pred_check_branch
          %319 = sbr.rel (%p317) target = $region28
        $region27: #{tpu_custom_call.1} parent=15 // pred_region
          %s320 = sand.u32 %s29, 1
          %s321 = scalar_lea.sflag [#allocation6], %s320
          %s322 = sand.u32 %s105, 1
          %s323 = smul.addr %s322, 8
          %s324 = scalar_lea.vmem [#allocation7], %s323
          %s326 = ssub.s32 128, 128
          %327 = vsyncadd %s321, %s326
          %s328 = smul.addr %s36, 128
          %s329 = scalar_lea.hbm %s2, %s328
          %s331 = sshll.u32 %s324, 4
          %s332 = int_to_ptr.vmem [resolvable:$true] %s331
          %334 = dma.hbm_to_vmem [thread:$0]  %s329, 128, %s332, %s321
        $region28: #{tpu_custom_call.1} parent=15 // pred_fallthru
          _
        // Predicated region
        $region29: #{tpu_custom_call.1} parent=15 // pred_check
          %p335 = pneg %p143
        $region30: #{tpu_custom_call.1} parent=15 // pred_check_branch
          %337 = sbr.rel (%p335) target = $region32
        $region31: #{tpu_custom_call.1} parent=15 // pred_region
          %s338 = sand.u32 %s29, 1
          %s339 = scalar_lea.sflag [#allocation9], %s338
          %s340 = sand.u32 %s133, 1
          %s341 = smul.addr %s340, 8
          %s342 = scalar_lea.vmem [#allocation8], %s341
          %s344 = ssub.s32 128, 128
          %345 = vsyncadd %s339, %s344
          %s346 = sadd.s32 %s37, %s36
          %s347 = smul.addr %s346, 128
          %s348 = scalar_lea.hbm %s3, %s347
          %s350 = sshll.u32 %s342, 4
          %s351 = int_to_ptr.vmem [resolvable:$true] %s350
          %353 = dma.hbm_to_vmem [thread:$0]  %s348, 128, %s351, %s339
        $region32: #{tpu_custom_call.1} parent=15 // pred_fallthru
          _
        // Predicated region
        $region33: #{tpu_custom_call.1} parent=15 // pred_check
          %p354 = pneg %p171
        $region34: #{tpu_custom_call.1} parent=15 // pred_check_branch
          %356 = sbr.rel (%p354) target = $region36
        $region35: #{tpu_custom_call.1} parent=15 // pred_region
          %s357 = sand.u32 %s29, 1
          %s358 = scalar_lea.sflag [#allocation9], %s357
          %s359 = sand.u32 %s161, 1
          %s360 = smul.addr %s359, 8
          %s361 = scalar_lea.vmem [#allocation10], %s360
          %s363 = ssub.s32 128, 128
          %364 = vsyncadd %s358, %s363
          %s365 = sadd.s32 %s37, %s36
          %s366 = smul.addr %s365, 128
          %s367 = scalar_lea.hbm %s4, %s366
          %s369 = sshll.u32 %s361, 4
          %s370 = int_to_ptr.vmem [resolvable:$true] %s369
          %372 = dma.hbm_to_vmem [thread:$0]  %s367, 128, %s370, %s358
        $region36: #{tpu_custom_call.1} parent=15 // pred_fallthru
          _
      $region16: #{tpu_custom_call.1} parent=5 // pred_fallthru
        _
      %p373 = scmp.le.s32.totalorder 1, %s29
      %p374 = scmp.lt.s32.totalorder %s29, 3
      %p375 = pnand %p373, %p374
      %p376 = pneg %p375
      // Predicated region
      $region37: #{tpu_custom_call.1} parent=5 // pred_check
        _
      $region38: #{tpu_custom_call.1} parent=5 // pred_check_branch
        %378 = sbr.rel (%p375) target = $region40
      $region39: #{tpu_custom_call.1} parent=5 // pred_region
        %s379 = ssub.s32 %s29, 1
        %s380 = sand.u32 %s56, 1
        %s381 = scalar_lea.sflag [#allocation3], %s380
        %s382 = sand.u32 %s56, 1
        %s383 = smul.addr %s382, 8
        %s384 = scalar_lea.vmem [#allocation2], %s383
        // Predicated region
        $region41: #{tpu_custom_call.1} parent=39 // pred_check
          %p385 = pneg %p69
        $region42: #{tpu_custom_call.1} parent=39 // pred_check_branch
          %387 = sbr.rel (%p385) target = $region44
        $region43: #{tpu_custom_call.1} parent=39 // pred_region
          %388 = dma.done %s381, 128
        $region44: #{tpu_custom_call.1} parent=39 // pred_fallthru
          _
        %s389 = sand.u32 %s34, 1
        %s390 = scalar_lea.sflag [#allocation6], %s389
        %s391 = sand.u32 %s82, 1
        %s392 = smul.addr %s391, 8
        %s393 = scalar_lea.vmem [#allocation5], %s392
        // Predicated region
        $region45: #{tpu_custom_call.1} parent=39 // pred_check
          %p394 = pneg %p95
        $region46: #{tpu_custom_call.1} parent=39 // pred_check_branch
          %396 = sbr.rel (%p394) target = $region48
        $region47: #{tpu_custom_call.1} parent=39 // pred_region
          %397 = dma.done %s390, 128
        $region48: #{tpu_custom_call.1} parent=39 // pred_fallthru
          _
        %s398 = sand.u32 %s34, 1
        %s399 = scalar_lea.sflag [#allocation6], %s398
        %s400 = sand.u32 %s108, 1
        %s401 = smul.addr %s400, 8
        %s402 = scalar_lea.vmem [#allocation7], %s401
        // Predicated region
        $region49: #{tpu_custom_call.1} parent=39 // pred_check
          %p403 = pneg %p121
        $region50: #{tpu_custom_call.1} parent=39 // pred_check_branch
          %405 = sbr.rel (%p403) target = $region52
        $region51: #{tpu_custom_call.1} parent=39 // pred_region
          %406 = dma.done %s399, 128
        $region52: #{tpu_custom_call.1} parent=39 // pred_fallthru
          _
        %s407 = sand.u32 %s34, 1
        %s408 = scalar_lea.sflag [#allocation9], %s407
        %s409 = sand.u32 %s136, 1
        %s410 = smul.addr %s409, 8
        %s411 = scalar_lea.vmem [#allocation8], %s410
        // Predicated region
        $region53: #{tpu_custom_call.1} parent=39 // pred_check
          %p412 = pneg %p149
        $region54: #{tpu_custom_call.1} parent=39 // pred_check_branch
          %414 = sbr.rel (%p412) target = $region56
        $region55: #{tpu_custom_call.1} parent=39 // pred_region
          %415 = dma.done %s408, 128
        $region56: #{tpu_custom_call.1} parent=39 // pred_fallthru
          _
        %s416 = sand.u32 %s34, 1
        %s417 = scalar_lea.sflag [#allocation9], %s416
        %s418 = sand.u32 %s164, 1
        %s419 = smul.addr %s418, 8
        %s420 = scalar_lea.vmem [#allocation10], %s419
        // Predicated region
        $region57: #{tpu_custom_call.1} parent=39 // pred_check
          %p421 = pneg %p177
        $region58: #{tpu_custom_call.1} parent=39 // pred_check_branch
          %423 = sbr.rel (%p421) target = $region60
        $region59: #{tpu_custom_call.1} parent=39 // pred_region
          %424 = dma.done %s417, 128
        $region60: #{tpu_custom_call.1} parent=39 // pred_fallthru
          _
        %s425 = sand.u32 %s56, 1
        %s426 = scalar_lea.sflag [#allocation3], %s425
        %s427 = sand.u32 %s56, 1
        %s428 = smul.addr %s427, 8
        %s429 = scalar_lea.vmem [#allocation2], %s428
        %p430 = pneg %p69
        %p431 = pneg %p66
        %s432 = sand.u32 %s34, 1
        %s433 = scalar_lea.sflag [#allocation6], %s432
        %s434 = sand.u32 %s82, 1
        %s435 = smul.addr %s434, 8
        %s436 = scalar_lea.vmem [#allocation5], %s435
        %p437 = pneg %p95
        %p438 = pneg %p92
        %s439 = sand.u32 %s34, 1
        %s440 = scalar_lea.sflag [#allocation6], %s439
        %s441 = sand.u32 %s108, 1
        %s442 = smul.addr %s441, 8
        %s443 = scalar_lea.vmem [#allocation7], %s442
        %p444 = pneg %p121
        %p445 = pneg %p118
        %s446 = sand.u32 %s34, 1
        %s447 = scalar_lea.sflag [#allocation9], %s446
        %s448 = sand.u32 %s136, 1
        %s449 = smul.addr %s448, 8
        %s450 = scalar_lea.vmem [#allocation8], %s449
        %p451 = pneg %p149
        %p452 = pneg %p146
        %s453 = sand.u32 %s34, 1
        %s454 = scalar_lea.sflag [#allocation9], %s453
        %s455 = sand.u32 %s164, 1
        %s456 = smul.addr %s455, 8
        %s457 = scalar_lea.vmem [#allocation10], %s456
        %p458 = pneg %p177
        %p459 = pneg %p174
        %p460 = pneg %p205
        %p461 = pneg %p202
        %s462 = sand.u32 %s192, 1
        %s463 = scalar_lea.sflag [#allocation4], %s462
        %s464 = sand.u32 %s192, 1
        %s465 = smul.addr %s464, 8
        %s466 = scalar_lea.vmem [#allocation11], %s465
        %p467 = pneg %p233
        %p468 = pneg %p230
        %s469 = sand.u32 %s34, 1
        %s470 = scalar_lea.sflag [#allocation13], %s469
        %s471 = sand.u32 %s220, 1
        %s472 = smul.addr %s471, 8
        %s473 = scalar_lea.vmem [#allocation12], %s472
        %p474 = pneg %p261
        %p475 = pneg %p258
        %s476 = sand.u32 %s34, 1
        %s477 = scalar_lea.sflag [#allocation13], %s476
        %s478 = sand.u32 %s248, 1
        %s479 = smul.addr %s478, 8
        %s480 = scalar_lea.vmem [#allocation14], %s479
        %v481 = vld [vmem:[%s384] sm:$0xff]
        %v482 = vld [vmem:[%s393] sm:$0xff]
        %vm483 = vcmask 130048
        %v485 = vsel %vm483, %v481, 0
        %v488 = vsel %vm483, %v482, 0
        %490 = vmatprep.subr.mxu0 0.0
        %491 = vmatpush1.xpose.msra.mxu0 %v488
        %492 = vmatprep.subr.mxu0 0.0
        %493 = vmatpush1.xpose.msra.mxu0 0.0
        %494 = vmatprep.subr.mxu0 0.0
        %495 = vmatpush1.xpose.msra.mxu0 0.0
        %496 = vmatprep.subr.mxu0 0.0
        %497 = vmatpush1.xpose.msra.mxu0 0.0
        %498 = vmatprep.subr.mxu0 0.0
        %499 = vmatpush1.xpose.msra.mxu0 0.0
        %500 = vmatprep.subr.mxu0 0.0
        %501 = vmatpush1.xpose.msra.mxu0 0.0
        %502 = vmatprep.subr.mxu0 0.0
        %503 = vmatpush1.xpose.msra.mxu0 0.0
        %504 = vmatprep.subr.mxu0 0.0
        %505 = vmatpush1.xpose.msra.mxu0 0.0
        %506 = vmatprep.subr.mxu0 0.0
        %507 = vmatpush1.xpose.msra.mxu0 0.0
        %508 = vmatprep.subr.mxu0 0.0
        %509 = vmatpush1.xpose.msra.mxu0 0.0
        %510 = vmatprep.subr.mxu0 0.0
        %511 = vmatpush1.xpose.msra.mxu0 0.0
        %512 = vmatprep.subr.mxu0 0.0
        %513 = vmatpush1.xpose.msra.mxu0 0.0
        %514 = vmatprep.subr.mxu0 0.0
        %515 = vmatpush1.xpose.msra.mxu0 0.0
        %516 = vmatprep.subr.mxu0 0.0
        %517 = vmatpush1.xpose.msra.mxu0 0.0
        %518 = vmatprep.subr.mxu0 0.0
        %519 = vmatpush1.xpose.msra.mxu0 0.0
        %520 = vmatprep.subr.mxu0 0.0
        %521 = vmatpush1.xpose.msra.mxu0 0.0
        %522 = vmatprep.subr.mxu0 0.0
        %523 = vmatpush1.xpose.msra.mxu0 0.0
        %524 = vmatprep.subr.mxu0 0.0
        %525 = vmatpush1.xpose.msra.mxu0 0.0
        %526 = vmatprep.subr.mxu0 0.0
        %527 = vmatpush1.xpose.msra.mxu0 0.0
        %528 = vmatprep.subr.mxu0 0.0
        %529 = vmatpush1.xpose.msra.mxu0 0.0
        %530 = vmatprep.subr.mxu0 0.0
        %531 = vmatpush1.xpose.msra.mxu0 0.0
        %532 = vmatprep.subr.mxu0 0.0
        %533 = vmatpush1.xpose.msra.mxu0 0.0
        %534 = vmatprep.subr.mxu0 0.0
        %535 = vmatpush1.xpose.msra.mxu0 0.0
        %536 = vmatprep.subr.mxu0 0.0
        %537 = vmatpush1.xpose.msra.mxu0 0.0
        %538 = vmatprep.subr.mxu0 0.0
        %539 = vmatpush1.xpose.msra.mxu0 0.0
        %540 = vmatprep.subr.mxu0 0.0
        %541 = vmatpush1.xpose.msra.mxu0 0.0
        %542 = vmatprep.subr.mxu0 0.0
        %543 = vmatpush1.xpose.msra.mxu0 0.0
        %544 = vmatprep.subr.mxu0 0.0
        %545 = vmatpush1.xpose.msra.mxu0 0.0
        %546 = vmatprep.subr.mxu0 0.0
        %547 = vmatpush1.xpose.msra.mxu0 0.0
        %548 = vmatprep.subr.mxu0 0.0
        %549 = vmatpush1.xpose.msra.mxu0 0.0
        %550 = vmatprep.subr.mxu0 0.0
        %551 = vmatpush1.xpose.msra.mxu0 0.0
        %552 = vmatprep.subr.mxu0 0.0
        %553 = vmatpush1.xpose.msra.mxu0 0.0
        %554 = vmatprep.mubr.f32.mxu0 0.0
        %555 = vmatmul.mubr.f32.gmra.mrb[0].mxu0 %v485
        %v556 = vpop.f32.mrb[0].mxu0
        %v557 = vadd.f32 0.0, %v556
        %v558 = vpop.f32.mrb[0].mxu0
        %559 = vdwg.mxu0
        %v560 = vmul.f32 %v557, 0.25
        %v561 = vmax.f32 %v560, -5.0
        %v562 = vmin.f32 %v561, 5.0
        %v563 = vld [vmem:[%s411] sm:$0xff]
        %v564 = vadd.f32 %v562, %v563
        %vm565 = vcmask 64512
        %v566 = vsel %vm565, %v564, -inf
        %567 = vmax.xlane.f32.xlu0 %v566
        %v568 = vpop.xlane.xlu0 %567
        %v569 = vsub.f32 %v564, %v568
        %v570 = vmul.f32 %v569, 1.442695
        %v571 = vpow.pop %v570
        %v572 = vsel %vm565, %v571, 0.0
        %573 = vadd.xlane.f32.xlu0 %v572
        %v574 = vpop.xlane.xlu0 %573
        %v575 = vrcp.pop %v574
        %v576 = vld [vmem:[%s420] sm:$0xff]
        %v577 = vxor.u32 %v576, 2147483648
        %v578 = vmul.f32 %v577, 1.442695
        %v579 = vpow.pop %v578
        %v580 = vadd.f32 %v579, 1.0
        %v581 = vrcp.pop %v580
        %v582 = vmul.f32 1.0, %v581
        %v583 = vmul.f32 %v582, %v575
        %v584 = vmul.f32 %v571, %v583
        %v585 = vld [vmem:[%s402] sm:$0xff]
        %v587 = vsel %vm565, %v584, 0
        %589 = vmatprep.subr.mxu0 0.0
        %590 = vmatpush1.msra.mxu0 %v585
        %591 = vmatprep.subr.mxu0 0.0
        %592 = vmatpush1.msra.mxu0 0.0
        %593 = vmatprep.subr.mxu0 0.0
        %594 = vmatpush1.msra.mxu0 0.0
        %595 = vmatprep.subr.mxu0 0.0
        %596 = vmatpush1.msra.mxu0 0.0
        %597 = vmatprep.subr.mxu0 0.0
        %598 = vmatpush1.msra.mxu0 0.0
        %599 = vmatprep.subr.mxu0 0.0
        %600 = vmatpush1.msra.mxu0 0.0
        %601 = vmatprep.subr.mxu0 0.0
        %602 = vmatpush1.msra.mxu0 0.0
        %603 = vmatprep.subr.mxu0 0.0
        %604 = vmatpush1.msra.mxu0 0.0
        %605 = vmatprep.subr.mxu0 0.0
        %606 = vmatpush1.msra.mxu0 0.0
        %607 = vmatprep.subr.mxu0 0.0
        %608 = vmatpush1.msra.mxu0 0.0
        %609 = vmatprep.subr.mxu0 0.0
        %610 = vmatpush1.msra.mxu0 0.0
        %611 = vmatprep.subr.mxu0 0.0
        %612 = vmatpush1.msra.mxu0 0.0
        %613 = vmatprep.subr.mxu0 0.0
        %614 = vmatpush1.msra.mxu0 0.0
        %615 = vmatprep.subr.mxu0 0.0
        %616 = vmatpush1.msra.mxu0 0.0
        %617 = vmatprep.subr.mxu0 0.0
        %618 = vmatpush1.msra.mxu0 0.0
        %619 = vmatprep.subr.mxu0 0.0
        %620 = vmatpush1.msra.mxu0 0.0
        %621 = vmatprep.subr.mxu0 0.0
        %622 = vmatpush1.msra.mxu0 0.0
        %623 = vmatprep.subr.mxu0 0.0
        %624 = vmatpush1.msra.mxu0 0.0
        %625 = vmatprep.subr.mxu0 0.0
        %626 = vmatpush1.msra.mxu0 0.0
        %627 = vmatprep.subr.mxu0 0.0
        %628 = vmatpush1.msra.mxu0 0.0
        %629 = vmatprep.subr.mxu0 0.0
        %630 = vmatpush1.msra.mxu0 0.0
        %631 = vmatprep.subr.mxu0 0.0
        %632 = vmatpush1.msra.mxu0 0.0
        %633 = vmatprep.subr.mxu0 0.0
        %634 = vmatpush1.msra.mxu0 0.0
        %635 = vmatprep.subr.mxu0 0.0
        %636 = vmatpush1.msra.mxu0 0.0
        %637 = vmatprep.subr.mxu0 0.0
        %638 = vmatpush1.msra.mxu0 0.0
        %639 = vmatprep.subr.mxu0 0.0
        %640 = vmatpush1.msra.mxu0 0.0
        %641 = vmatprep.subr.mxu0 0.0
        %642 = vmatpush1.msra.mxu0 0.0
        %643 = vmatprep.subr.mxu0 0.0
        %644 = vmatpush1.msra.mxu0 0.0
        %645 = vmatprep.subr.mxu0 0.0
        %646 = vmatpush1.msra.mxu0 0.0
        %647 = vmatprep.subr.mxu0 0.0
        %648 = vmatpush1.msra.mxu0 0.0
        %649 = vmatprep.subr.mxu0 0.0
        %650 = vmatpush1.msra.mxu0 0.0
        %651 = vmatprep.subr.mxu0 0.0
        %652 = vmatpush1.msra.mxu0 0.0
        %653 = vmatprep.mubr.f32.mxu0 0.0
        %654 = vmatmul.mubr.f32.gmra.mrb[0].mxu0 %v587
        %v655 = vpop.f32.mrb[0].mxu0
        %v656 = vadd.f32 0.0, %v655
        %v657 = vpop.f32.mrb[0].mxu0
        %658 = vdwg.mxu0
        %659 = vst.msk [vmem:[%s473] sm:$0xff] %vm565, %v564
        %660 = vst.msk [vmem:[%s480] sm:$0xff] %vm565, %v584
        %661 = vst.msk [vmem:[%s466] sm:$0xff] %vm483, %v656
        %s662 = sand.u32 %s192, 1
        %s663 = scalar_lea.sflag [#allocation4], %s662
        %s664 = sand.u32 %s192, 1
        %s665 = smul.addr %s664, 8
        %s666 = scalar_lea.vmem [#allocation11], %s665
        %s667 = sand.u32 %s34, 1
        %s668 = scalar_lea.sflag [#allocation13], %s667
        %s669 = sand.u32 %s220, 1
        %s670 = smul.addr %s669, 8
        %s671 = scalar_lea.vmem [#allocation12], %s670
        %s672 = sand.u32 %s34, 1
        %s673 = scalar_lea.sflag [#allocation13], %s672
        %s674 = sand.u32 %s248, 1
        %s675 = smul.addr %s674, 8
        %s676 = scalar_lea.vmem [#allocation14], %s675
        // Predicated region
        $region61: #{tpu_custom_call.1} parent=39 // pred_check
          %p677 = pneg %p202
        $region62: #{tpu_custom_call.1} parent=39 // pred_check_branch
          %679 = sbr.rel (%p677) target = $region64
        $region63: #{tpu_custom_call.1} parent=39 // pred_region
          %s681 = ssub.s32 128, 128
          %682 = vsyncadd %s663, %s681
          %s683 = sadd.s32 %s39, %s38
          %s684 = smul.addr %s683, 128
          %s685 = scalar_lea.hbm %s5, %s684
          %s687 = sshll.u32 %s666, 4
          %s688 = int_to_ptr.vmem [resolvable:$true] %s687
          %690 = dma.vmem_to_hbm [thread:$0]  %s688, 128, %s685, %s663
        $region64: #{tpu_custom_call.1} parent=39 // pred_fallthru
          _
        // Predicated region
        $region65: #{tpu_custom_call.1} parent=39 // pred_check
          %p691 = pneg %p230
        $region66: #{tpu_custom_call.1} parent=39 // pred_check_branch
          %693 = sbr.rel (%p691) target = $region68
        $region67: #{tpu_custom_call.1} parent=39 // pred_region
          %s695 = ssub.s32 128, 128
          %696 = vsyncadd %s668, %s695
          %s697 = sadd.s32 %s39, %s38
          %s698 = smul.addr %s697, 128
          %s699 = scalar_lea.hbm %s6, %s698
          %s701 = sshll.u32 %s671, 4
          %s702 = int_to_ptr.vmem [resolvable:$true] %s701
          %704 = dma.vmem_to_hbm [thread:$0]  %s702, 128, %s699, %s668
        $region68: #{tpu_custom_call.1} parent=39 // pred_fallthru
          _
        // Predicated region
        $region69: #{tpu_custom_call.1} parent=39 // pred_check
          %p705 = pneg %p258
        $region70: #{tpu_custom_call.1} parent=39 // pred_check_branch
          %707 = sbr.rel (%p705) target = $region72
        $region71: #{tpu_custom_call.1} parent=39 // pred_region
          %s709 = ssub.s32 128, 128
          %710 = vsyncadd %s673, %s709
          %s711 = sadd.s32 %s39, %s38
          %s712 = smul.addr %s711, 128
          %s713 = scalar_lea.hbm %s7, %s712
          %s715 = sshll.u32 %s676, 4
          %s716 = int_to_ptr.vmem [resolvable:$true] %s715
          %718 = dma.vmem_to_hbm [thread:$0]  %s716, 128, %s713, %s673
        $region72: #{tpu_custom_call.1} parent=39 // pred_fallthru
          _
      $region40: #{tpu_custom_call.1} parent=5 // pred_fallthru
        _
      %p719 = scmp.le.s32.totalorder 2, %s29
      // Predicated region
      $region73: #{tpu_custom_call.1} parent=5 // pred_check
        %p720 = pneg %p719
      $region74: #{tpu_custom_call.1} parent=5 // pred_check_branch
        %722 = sbr.rel (%p720) target = $region76
      $region75: #{tpu_custom_call.1} parent=5 // pred_region
        %s723 = ssub.s32 %s29, 2
        // Predicated region
        $region77: #{tpu_custom_call.1} parent=75 // pred_check
          %p724 = pneg %p208
        $region78: #{tpu_custom_call.1} parent=75 // pred_check_branch
          %726 = sbr.rel (%p724) target = $region80
        $region79: #{tpu_custom_call.1} parent=75 // pred_region
          %s727 = sand.u32 %s193, 1
          %s728 = scalar_lea.sflag [#allocation4], %s727
          %s729 = sand.u32 %s193, 1
          %s730 = smul.addr %s729, 8
          %s731 = scalar_lea.vmem [#allocation11], %s730
          %732 = dma.done %s728, 128
        $region80: #{tpu_custom_call.1} parent=75 // pred_fallthru
          _
        // Predicated region
        $region81: #{tpu_custom_call.1} parent=75 // pred_check
          %p733 = pneg %p236
        $region82: #{tpu_custom_call.1} parent=75 // pred_check_branch
          %735 = sbr.rel (%p733) target = $region84
        $region83: #{tpu_custom_call.1} parent=75 // pred_region
          %s736 = sand.u32 %s35, 1
          %s737 = scalar_lea.sflag [#allocation13], %s736
          %s738 = sand.u32 %s221, 1
          %s739 = smul.addr %s738, 8
          %s740 = scalar_lea.vmem [#allocation12], %s739
          %741 = dma.done %s737, 128
        $region84: #{tpu_custom_call.1} parent=75 // pred_fallthru
          _
        // Predicated region
        $region85: #{tpu_custom_call.1} parent=75 // pred_check
          %p742 = pneg %p264
        $region86: #{tpu_custom_call.1} parent=75 // pred_check_branch
          %744 = sbr.rel (%p742) target = $region88
        $region87: #{tpu_custom_call.1} parent=75 // pred_region
          %s745 = sand.u32 %s35, 1
          %s746 = scalar_lea.sflag [#allocation13], %s745
          %s747 = sand.u32 %s249, 1
          %s748 = smul.addr %s747, 8
          %s749 = scalar_lea.vmem [#allocation14], %s748
          %750 = dma.done %s746, 128
        $region88: #{tpu_custom_call.1} parent=75 // pred_fallthru
          _
      $region76: #{tpu_custom_call.1} parent=5 // pred_fallthru
        _
    $region6: #{tpu_custom_call.1} parent=1 // loop_footer
      %s33 = sadd.s32 1, %s29
    $region7: #{tpu_custom_call.1} parent=1 // loop_footer_branch
      %28 = sbr.rel target = $region3
    $region8: #{tpu_custom_call.1} parent=1 // loop_exit
      _
    %751 = vsyncpa [#allocation3], 1
    %s752 = scalar_lea.sflag [#allocation3], 1
    %753 = vsyncpa %s752, 1
    %754 = vsyncpa [#allocation6], 1
    %s755 = scalar_lea.sflag [#allocation6], 1
    %756 = vsyncpa %s755, 1
    %757 = vsyncpa [#allocation9], 1
    %s758 = scalar_lea.sflag [#allocation9], 1
    %759 = vsyncpa %s758, 1
    %760 = vsyncpa [#allocation4], 1
    %s761 = scalar_lea.sflag [#allocation4], 1
    %762 = vsyncpa %s761, 1
    %763 = vsyncpa [#allocation13], 1
    %s764 = scalar_lea.sflag [#allocation13], 1
    %765 = vsyncpa %s764, 1

</llo_original>
